<compile_context>
chip_gen: v5e
topology: v5e:2x2
jax: 0.10.0
libtpu: 0.0.40
codegen_flags: <defaults>
</compile_context>

<pallas_src>
import math

import jax
import jax.numpy as jnp
from jax.experimental import pallas as pl
from jax.experimental.pallas import tpu as pltpu

LANE = 128     # lane (last-dim) alignment for vregs / MXU
SUBLANE = 8    # sublane alignment for f32 (16 for bf16-packed activations)


def _round_up(x, m):
    return ((x + m - 1) // m) * m


def _tpu_generation():
    """Return (vmem_capacity_bytes, has_bf16_vpu) with conservative fallbacks."""
    kind = ""
    try:
        kind = jax.devices()[0].device_kind.lower()
    except Exception:
        pass
    if "v5" in kind:
        vmem_cap, bf16_vpu = 128 << 20, False      # v5e: bf16 MXU, but no bf16 VPU/EUP
    elif "v6" in kind:
        vmem_cap, bf16_vpu = 128 << 20, True
    elif "v7" in kind:
        vmem_cap, bf16_vpu = 64 << 20, True
    else:
        vmem_cap, bf16_vpu = 64 << 20, False       # unknown chip: be conservative
    try:
        vmem_cap = pltpu.get_tpu_info().vmem_capacity_bytes   # authoritative if present
    except Exception:
        pass
    return vmem_cap, bf16_vpu


def _make_mlp_kernel(n_layers, act_dtype, matmul_dtype):
    def kernel(*refs):
        # refs = (x_ref, w0, b0, w1, b1, ..., wL, bL, out_ref)
        x_ref, out_ref = refs[0], refs[-1]
        x = x_ref[...]
        for l in range(n_layers):
            w = refs[1 + 2 * l][...]                       # (in_l, out_l) in matmul_dtype
            b = refs[2 + 2 * l][...]                       # (1, out_l) f32
            y = jnp.dot(x.astype(matmul_dtype), w,
                        preferred_element_type=jnp.float32)  # bf16 MXU, f32 accumulate
            y = y + b                                        # bias add in f32
            if l < n_layers - 1:
                # bf16 tanh/VPU on v6e/v7x (act_dtype=bf16); f32 on v5e (no bf16 VPU/EUP).
                y = jnp.tanh(y.astype(act_dtype))
                # TODO(synk): training-mode dropout (p) omitted; eval-mode => identity.
            x = y
        out_ref[...] = x.astype(out_ref.dtype)
    return kernel


class PallasMLP:
    """Pad/cast parameters once; per-call only pads x and launches one fused kernel."""

    def __init__(self, params, *, use_bf16_matmul=True, block_batch=512):
        vmem_cap, bf16_vpu = _tpu_generation()
        self.vmem_cap = vmem_cap
        self.block_batch = block_batch
        self.n_layers = len(params)
        self.input_dim = params[0][0].shape[0]
        self.out_dim = params[-1][0].shape[1]

        dims = [self.input_dim] + [w.shape[1] for w, _ in params]
        # Narrow input stays unpadded (block dim == full array dim is legal);
        # hidden/output dims lane-padded (unmasked lane-dense stores, full MXU width).
        pdims = [dims[0] if dims[0] < LANE else _round_up(dims[0], LANE)]
        pdims += [_round_up(d, LANE) for d in dims[1:]]
        self.dims, self.pdims = dims, pdims

        # bf16 MXU operands on ALL generations; bf16 activations only where VPU/EUP is bf16.
        self.matmul_dtype = jnp.bfloat16 if use_bf16_matmul else jnp.float32
        self.act_dtype = jnp.bfloat16 if (use_bf16_matmul and bf16_vpu) else jnp.float32
        self.act_itemsize = jnp.dtype(self.act_dtype).itemsize
        self.sub = SUBLANE * (4 // self.act_itemsize)       # 8 for f32, 16 for bf16

        # ---- Pad + cast parameters ONCE (hoisted out of the per-call hot path) ----
        self.weights, self.biases = [], []
        for l, (w, b) in enumerate(params):
            w_p = jnp.zeros((pdims[l], pdims[l + 1]), self.matmul_dtype)
            w_p = w_p.at[: w.shape[0], : w.shape[1]].set(w.astype(self.matmul_dtype))
            b_p = jnp.zeros((1, pdims[l + 1]), jnp.float32)
            b_p = b_p.at[0, : b.shape[0]].set(b.astype(jnp.float32))
            self.weights.append(w_p)
            self.biases.append(b_p)
        self.weight_bytes = (sum(a.nbytes for a in self.weights)
                             + sum(a.nbytes for a in self.biases))

        if self.weight_bytes > int(0.6 * vmem_cap):
            # TODO(synk): large-layer fallback (per-layer K/N-tiled matmul or
            # pltpu.emit_pipeline over weight chunks) when weights don't fit VMEM-resident.
            raise NotImplementedError(
                "resident-weight footprint exceeds this generation's VMEM budget")

        self._single_buffer = True
        self._call = jax.jit(lambda xx: self._forward(xx, single_buffer=True))

    def __call__(self, x):
        try:
            return self._call(x)
        except Exception:
            if self._single_buffer:
                # Fallback for Pallas versions that reject pl.Buffered(1) weight specs.
                self._single_buffer = False
                self._call = jax.jit(lambda xx: self._forward(xx, single_buffer=False))
                return self._call(x)
            raise

    def _forward(self, x, single_buffer):
        batch = x.shape[0]
        dims, pdims, n_layers, sub = self.dims, self.pdims, self.n_layers, self.sub

        # ---- batch tiling: >=2 grid steps when possible so both v7x TCs get work ----
        pb = _round_up(batch, sub)
        tb = min(self.block_batch, pb)
        if pb > sub and pb // tb < 2:
            tb = _round_up((pb + 1) // 2, sub)

        # Shrink the tile if the working set would not fit this generation's VMEM.
        def _tile_bytes(t):
            return (2 * t * pdims[0] * self.act_itemsize   # double-buffered input tile
                    + 2 * t * pdims[-1] * 4                # double-buffered output tile
                    + 2 * t * max(pdims) * 4)              # in-kernel f32 intermediates
        w_mult = 1 if single_buffer else 2
        while tb > sub and (w_mult * self.weight_bytes + _tile_bytes(tb)
                            > int(0.7 * self.vmem_cap)):
            tb = max(sub, _round_up(tb // 2, sub))
        pb = _round_up(pb, tb)
        grid = (pb // tb,)

        # Only x is padded per call (cheap jnp.pad); parameters were prepared in __init__.
        x_p = jnp.pad(x.astype(self.act_dtype),
                      ((0, pb - batch), (0, pdims[0] - dims[0])))

        pmode = pl.Buffered(1) if single_buffer else None
        flat_args = [x_p]
        in_specs = [pl.BlockSpec((tb, pdims[0]), lambda i: (i, 0))]
        for l in range(n_layers):
            flat_args += [self.weights[l], self.biases[l]]
            # Constant index_map -> fetched once, VMEM-resident; single-buffered to
            # halve the resident weight footprint (matters under v7x's 64 MiB VMEM).
            in_specs.append(pl.BlockSpec((pdims[l], pdims[l + 1]), lambda i: (0, 0),
                                         pipeline_mode=pmode))
            in_specs.append(pl.BlockSpec((1, pdims[l + 1]), lambda i: (0, 0),
                                         pipeline_mode=pmode))

        out_specs = pl.BlockSpec((tb, pdims[-1]), lambda i: (i, 0))
        out_shape = jax.ShapeDtypeStruct((pb, pdims[-1]), jnp.float32)

        flops = int(2 * sum(batch * dims[l] * dims[l + 1] for l in range(n_layers)))
        transcendentals = int(batch * sum(dims[1:-1]))
        bytes_accessed = int(x_p.nbytes + self.weight_bytes + pb * pdims[-1] * 4)

        # Per-generation VMEM request: working set + slack, capped below physical capacity.
        headroom = (12 << 20) if self.vmem_cap <= (64 << 20) else (16 << 20)
        need = w_mult * self.weight_bytes + _tile_bytes(tb) + (4 << 20)
        vmem_limit = int(min(self.vmem_cap - headroom, max(32 << 20, need)))

        out = pl.pallas_call(
            _make_mlp_kernel(n_layers, self.act_dtype, self.matmul_dtype),
            out_shape=out_shape,
            grid=grid,
            in_specs=in_specs,
            out_specs=out_specs,
            compiler_params=pltpu.CompilerParams(
                dimension_semantics=("parallel",),     # batch tiles shard across TCs (v7x)
                vmem_limit_bytes=vmem_limit,
            ),
            cost_estimate=pl.CostEstimate(
                flops=flops,
                transcendentals=transcendentals,
                bytes_accessed=bytes_accessed,
            ),
        )(*flat_args)

        if pb == batch and pdims[-1] == self.out_dim:
            return out                                  # no extra HBM pass when unpadded
        return out[:batch, :self.out_dim]


def init_params(key, input_dim, hidden_dim, output_dim):
    """PyTorch-Linear-style init: U(-1/sqrt(fan_in), 1/sqrt(fan_in)); weights stored (in, out)."""
    dims = [input_dim] + list(hidden_dim) + [output_dim]
    params = []
    for i in range(len(dims) - 1):
        fan_in, fan_out = dims[i], dims[i + 1]
        key, kw, kb = jax.random.split(key, 3)
        bound = 1.0 / math.sqrt(fan_in)
        w = jax.random.uniform(kw, (fan_in, fan_out), jnp.float32, -bound, bound)
        b = jax.random.uniform(kb, (fan_out,), jnp.float32, -bound, bound)
        params.append((w, b))
    return params


def reference_forward(x, params):
    for i, (w, b) in enumerate(params):
        x = x @ w + b
        if i < len(params) - 1:
            x = jnp.tanh(x)
    return x


if __name__ == "__main__":
    # Small shapes consistent with the module's forward.
    input_dim, hidden_dim, output_dim = 32, [64, 32], 16
    # p (dropout prob) unused in the eval-mode forward.

    key = jax.random.PRNGKey(0)
    key, kx = jax.random.split(key)
    params = init_params(key, input_dim, hidden_dim, output_dim)

    x_small = jax.random.normal(kx, (8, input_dim), jnp.float32)
    ref_small = reference_forward(x_small, params)

    # 1) f32 MXU path: exact numerics.
    mlp_f32 = PallasMLP(params, use_bf16_matmul=False)
    out_f32 = jax.block_until_ready(mlp_f32(x_small))
    assert out_f32.shape == (8, output_dim)
    assert jnp.allclose(out_f32, ref_small, atol=1e-5, rtol=1e-5)

    # 2) default path: bf16 MXU operands everywhere (+ bf16 activations on v6e/v7x).
    mlp = PallasMLP(params)
    out_bf16 = jax.block_until_ready(mlp(x_small))
    assert out_bf16.shape == (8, output_dim)
    assert jnp.allclose(out_bf16, ref_small, atol=5e-2, rtol=5e-2)

    # 3) batch not a multiple of the tile -> multi-step grid (both v7x TCs) + padding path.
    key, kx2 = jax.random.split(key)
    x_big = jax.random.normal(kx2, (300, input_dim), jnp.float32)
    mlp_tiled = PallasMLP(params, block_batch=128)
    out_big = jax.block_until_ready(mlp_tiled(x_big))
    ref_big = reference_forward(x_big, params)
    assert out_big.shape == (300, output_dim)
    assert jnp.allclose(out_big, ref_big, atol=5e-2, rtol=5e-2)

    print("KERNEL_OK")
</pallas_src>

<mosaic_0001>
module attributes {stable_mosaic.version = 11 : i64} {
  func.func @kernel(%arg0: i32, %arg1: memref<8x32xf32, #tpu.memory_space<vmem>>, %arg2: memref<32x128xf32, #tpu.memory_space<vmem>>, %arg3: memref<1x128xf32, #tpu.memory_space<vmem>>, %arg4: memref<128x128xf32, #tpu.memory_space<vmem>>, %arg5: memref<1x128xf32, #tpu.memory_space<vmem>>, %arg6: memref<128x128xf32, #tpu.memory_space<vmem>>, %arg7: memref<1x128xf32, #tpu.memory_space<vmem>>, %arg8: memref<8x128xf32, #tpu.memory_space<vmem>>) attributes {dimension_semantics = [#tpu.dimension_semantics<parallel>], iteration_bounds = array<i64: 1>, scalar_prefetch = 0 : i64, scratch_operands = 0 : i64, tpu.core_type = #tpu.core_type<tc>, window_params = [{transform_indices = @transform_0, window_bounds = array<i64: 8, 32>}, {pipeline_mode = #tpu.pipeline_mode<synchronous>, transform_indices = @transform_1, window_bounds = array<i64: 32, 128>}, {pipeline_mode = #tpu.pipeline_mode<synchronous>, transform_indices = @transform_2, window_bounds = array<i64: 1, 128>}, {pipeline_mode = #tpu.pipeline_mode<synchronous>, transform_indices = @transform_3, window_bounds = array<i64: 128, 128>}, {pipeline_mode = #tpu.pipeline_mode<synchronous>, transform_indices = @transform_4, window_bounds = array<i64: 1, 128>}, {pipeline_mode = #tpu.pipeline_mode<synchronous>, transform_indices = @transform_5, window_bounds = array<i64: 128, 128>}, {pipeline_mode = #tpu.pipeline_mode<synchronous>, transform_indices = @transform_6, window_bounds = array<i64: 1, 128>}, {transform_indices = @transform_7, window_bounds = array<i64: 8, 128>}]} {
    %c0 = arith.constant 0 : index
    %c0_0 = arith.constant 0 : index
    %0 = vector.load %arg1[%c0, %c0_0] : memref<8x32xf32, #tpu.memory_space<vmem>>, vector<8x32xf32>
    %c0_1 = arith.constant 0 : index
    %c0_2 = arith.constant 0 : index
    %1 = vector.load %arg2[%c0_1, %c0_2] : memref<32x128xf32, #tpu.memory_space<vmem>>, vector<32x128xf32>
    %c0_3 = arith.constant 0 : index
    %c0_4 = arith.constant 0 : index
    %2 = vector.load %arg3[%c0_3, %c0_4] : memref<1x128xf32, #tpu.memory_space<vmem>>, vector<1x128xf32>
    %cst = arith.constant dense<0.000000e+00> : vector<8x128xf32>
    %3 = tpu.matmul %0, %1, %cst {dimension_numbers = #tpu.dot_dimension_numbers<[1], [0], [0], [1], [0, 0, 1, 1], [], []>} : vector<8x32xf32>, vector<32x128xf32>, vector<8x128xf32> -> vector<8x128xf32>
    %4 = vector.broadcast %2 : vector<1x128xf32> to vector<8x128xf32>
    %5 = arith.addf %3, %4 : vector<8x128xf32>
    %6 = math.tanh %5 : vector<8x128xf32>
    %c0_5 = arith.constant 0 : index
    %c0_6 = arith.constant 0 : index
    %7 = vector.load %arg4[%c0_5, %c0_6] : memref<128x128xf32, #tpu.memory_space<vmem>>, vector<128x128xf32>
    %c0_7 = arith.constant 0 : index
    %c0_8 = arith.constant 0 : index
    %8 = vector.load %arg5[%c0_7, %c0_8] : memref<1x128xf32, #tpu.memory_space<vmem>>, vector<1x128xf32>
    %cst_9 = arith.constant dense<0.000000e+00> : vector<8x128xf32>
    %9 = tpu.matmul %6, %7, %cst_9 {dimension_numbers = #tpu.dot_dimension_numbers<[1], [0], [0], [1], [0, 0, 1, 1], [], []>} : vector<8x128xf32>, vector<128x128xf32>, vector<8x128xf32> -> vector<8x128xf32>
    %10 = vector.broadcast %8 : vector<1x128xf32> to vector<8x128xf32>
    %11 = arith.addf %9, %10 : vector<8x128xf32>
    %12 = math.tanh %11 : vector<8x128xf32>
    %c0_10 = arith.constant 0 : index
    %c0_11 = arith.constant 0 : index
    %13 = vector.load %arg6[%c0_10, %c0_11] : memref<128x128xf32, #tpu.memory_space<vmem>>, vector<128x128xf32>
    %c0_12 = arith.constant 0 : index
    %c0_13 = arith.constant 0 : index
    %14 = vector.load %arg7[%c0_12, %c0_13] : memref<1x128xf32, #tpu.memory_space<vmem>>, vector<1x128xf32>
    %cst_14 = arith.constant dense<0.000000e+00> : vector<8x128xf32>
    %15 = tpu.matmul %12, %13, %cst_14 {dimension_numbers = #tpu.dot_dimension_numbers<[1], [0], [0], [1], [0, 0, 1, 1], [], []>} : vector<8x128xf32>, vector<128x128xf32>, vector<8x128xf32> -> vector<8x128xf32>
    %16 = vector.broadcast %14 : vector<1x128xf32> to vector<8x128xf32>
    %17 = arith.addf %15, %16 : vector<8x128xf32>
    %c0_15 = arith.constant 0 : index
    %c0_16 = arith.constant 0 : index
    %18 = vector.load %arg8[%c0_15, %c0_16] : memref<8x128xf32, #tpu.memory_space<vmem>>, vector<8x128xf32>
    tpu.vector_store %arg8[%c0_15, %c0_16], %17 {strides = array<i32>} : memref<8x128xf32, #tpu.memory_space<vmem>>, vector<8x128xf32>,
    return
  }
  func.func @transform_0(%arg0: i32) -> (i32, i32) {
    %c0_i32 = arith.constant 0 : i32
    %c0_i32_0 = arith.constant 0 : i32
    return %arg0, %c0_i32 : i32, i32
  }
  func.func @transform_1(%arg0: i32) -> (i32, i32) {
    %c0_i32 = arith.constant 0 : i32
    %c0_i32_0 = arith.constant 0 : i32
    %c0_i32_1 = arith.constant 0 : i32
    return %c0_i32, %c0_i32_0 : i32, i32
  }
  func.func @transform_2(%arg0: i32) -> (i32, i32) {
    %c0_i32 = arith.constant 0 : i32
    %c0_i32_0 = arith.constant 0 : i32
    %c0_i32_1 = arith.constant 0 : i32
    return %c0_i32, %c0_i32_0 : i32, i32
  }
  func.func @transform_3(%arg0: i32) -> (i32, i32) {
    %c0_i32 = arith.constant 0 : i32
    %c0_i32_0 = arith.constant 0 : i32
    %c0_i32_1 = arith.constant 0 : i32
    return %c0_i32, %c0_i32_0 : i32, i32
  }
  func.func @transform_4(%arg0: i32) -> (i32, i32) {
    %c0_i32 = arith.constant 0 : i32
    %c0_i32_0 = arith.constant 0 : i32
    %c0_i32_1 = arith.constant 0 : i32
    return %c0_i32, %c0_i32_0 : i32, i32
  }
  func.func @transform_5(%arg0: i32) -> (i32, i32) {
    %c0_i32 = arith.constant 0 : i32
    %c0_i32_0 = arith.constant 0 : i32
    %c0_i32_1 = arith.constant 0 : i32
    return %c0_i32, %c0_i32_0 : i32, i32
  }
  func.func @transform_6(%arg0: i32) -> (i32, i32) {
    %c0_i32 = arith.constant 0 : i32
    %c0_i32_0 = arith.constant 0 : i32
    %c0_i32_1 = arith.constant 0 : i32
    return %c0_i32, %c0_i32_0 : i32, i32
  }
  func.func @transform_7(%arg0: i32) -> (i32, i32) {
    %c0_i32 = arith.constant 0 : i32
    %c0_i32_0 = arith.constant 0 : i32
    return %arg0, %c0_i32 : i32, i32
  }
}

module attributes {stable_mosaic.version = 11 : i64} {
  func.func @kernel(%arg0: i32, %arg1: memref<8x32xf32, #tpu.memory_space<vmem>>, %arg2: memref<32x128xf32, #tpu.memory_space<vmem>>, %arg3: memref<1x128xf32, #tpu.memory_space<vmem>>, %arg4: memref<128x128xf32, #tpu.memory_space<vmem>>, %arg5: memref<1x128xf32, #tpu.memory_space<vmem>>, %arg6: memref<128x128xf32, #tpu.memory_space<vmem>>, %arg7: memref<1x128xf32, #tpu.memory_space<vmem>>, %arg8: memref<8x128xf32, #tpu.memory_space<vmem>>) attributes {dimension_semantics = [#tpu.dimension_semantics<parallel>], iteration_bounds = array<i64: 1>, scalar_prefetch = 0 : i64, scratch_operands = 0 : i64, tpu.core_type = #tpu.core_type<tc>, window_params = [{transform_indices = @transform_0, window_bounds = array<i64: 8, 32>}, {pipeline_mode = #tpu.pipeline_mode<synchronous>, transform_indices = @transform_1, window_bounds = array<i64: 32, 128>}, {pipeline_mode = #tpu.pipeline_mode<synchronous>, transform_indices = @transform_2, window_bounds = array<i64: 1, 128>}, {pipeline_mode = #tpu.pipeline_mode<synchronous>, transform_indices = @transform_3, window_bounds = array<i64: 128, 128>}, {pipeline_mode = #tpu.pipeline_mode<synchronous>, transform_indices = @transform_4, window_bounds = array<i64: 1, 128>}, {pipeline_mode = #tpu.pipeline_mode<synchronous>, transform_indices = @transform_5, window_bounds = array<i64: 128, 128>}, {pipeline_mode = #tpu.pipeline_mode<synchronous>, transform_indices = @transform_6, window_bounds = array<i64: 1, 128>}, {transform_indices = @transform_7, window_bounds = array<i64: 8, 128>}]} {
    %c0 = arith.constant 0 : index
    %c0_0 = arith.constant 0 : index
    %0 = vector.load %arg1[%c0, %c0_0] : memref<8x32xf32, #tpu.memory_space<vmem>>, vector<8x32xf32>
    %c0_1 = arith.constant 0 : index
    %c0_2 = arith.constant 0 : index
    %1 = vector.load %arg2[%c0_1, %c0_2] : memref<32x128xf32, #tpu.memory_space<vmem>>, vector<32x128xf32>
    %c0_3 = arith.constant 0 : index
    %c0_4 = arith.constant 0 : index
    %2 = vector.load %arg3[%c0_3, %c0_4] : memref<1x128xf32, #tpu.memory_space<vmem>>, vector<1x128xf32>
    %cst = arith.constant dense<0.000000e+00> : vector<8x128xf32>
    %3 = tpu.matmul %0, %1, %cst {dimension_numbers = #tpu.dot_dimension_numbers<[1], [0], [0], [1], [0, 0, 1, 1], [], []>} : vector<8x32xf32>, vector<32x128xf32>, vector<8x128xf32> -> vector<8x128xf32>
    %4 = vector.broadcast %2 : vector<1x128xf32> to vector<8x128xf32>
    %5 = arith.addf %3, %4 : vector<8x128xf32>
    %6 = math.tanh %5 : vector<8x128xf32>
    %c0_5 = arith.constant 0 : index
    %c0_6 = arith.constant 0 : index
    %7 = vector.load %arg4[%c0_5, %c0_6] : memref<128x128xf32, #tpu.memory_space<vmem>>, vector<128x128xf32>
    %c0_7 = arith.constant 0 : index
    %c0_8 = arith.constant 0 : index
    %8 = vector.load %arg5[%c0_7, %c0_8] : memref<1x128xf32, #tpu.memory_space<vmem>>, vector<1x128xf32>
    %cst_9 = arith.constant dense<0.000000e+00> : vector<8x128xf32>
    %9 = tpu.matmul %6, %7, %cst_9 {dimension_numbers = #tpu.dot_dimension_numbers<[1], [0], [0], [1], [0, 0, 1, 1], [], []>} : vector<8x128xf32>, vector<128x128xf32>, vector<8x128xf32> -> vector<8x128xf32>
    %10 = vector.broadcast %8 : vector<1x128xf32> to vector<8x128xf32>
    %11 = arith.addf %9, %10 : vector<8x128xf32>
    %12 = math.tanh %11 : vector<8x128xf32>
    %c0_10 = arith.constant 0 : index
    %c0_11 = arith.constant 0 : index
    %13 = vector.load %arg6[%c0_10, %c0_11] : memref<128x128xf32, #tpu.memory_space<vmem>>, vector<128x128xf32>
    %c0_12 = arith.constant 0 : index
    %c0_13 = arith.constant 0 : index
    %14 = vector.load %arg7[%c0_12, %c0_13] : memref<1x128xf32, #tpu.memory_space<vmem>>, vector<1x128xf32>
    %cst_14 = arith.constant dense<0.000000e+00> : vector<8x128xf32>
    %15 = tpu.matmul %12, %13, %cst_14 {dimension_numbers = #tpu.dot_dimension_numbers<[1], [0], [0], [1], [0, 0, 1, 1], [], []>} : vector<8x128xf32>, vector<128x128xf32>, vector<8x128xf32> -> vector<8x128xf32>
    %16 = vector.broadcast %14 : vector<1x128xf32> to vector<8x128xf32>
    %17 = arith.addf %15, %16 : vector<8x128xf32>
    %c0_15 = arith.constant 0 : index
    %c0_16 = arith.constant 0 : index
    %18 = vector.load %arg8[%c0_15, %c0_16] : memref<8x128xf32, #tpu.memory_space<vmem>>, vector<8x128xf32>
    tpu.vector_store %arg8[%c0_15, %c0_16], %17 {strides = array<i32>} : memref<8x128xf32, #tpu.memory_space<vmem>>, vector<8x128xf32>,
    return
  }
  func.func @transform_0(%arg0: i32) -> (i32, i32) {
    %c0_i32 = arith.constant 0 : i32
    %c0_i32_0 = arith.constant 0 : i32
    return %arg0, %c0_i32 : i32, i32
  }
  func.func @transform_1(%arg0: i32) -> (i32, i32) {
    %c0_i32 = arith.constant 0 : i32
    %c0_i32_0 = arith.constant 0 : i32
    %c0_i32_1 = arith.constant 0 : i32
    return %c0_i32, %c0_i32_0 : i32, i32
  }
  func.func @transform_2(%arg0: i32) -> (i32, i32) {
    %c0_i32 = arith.constant 0 : i32
    %c0_i32_0 = arith.constant 0 : i32
    %c0_i32_1 = arith.constant 0 : i32
    return %c0_i32, %c0_i32_0 : i32, i32
  }
  func.func @transform_3(%arg0: i32) -> (i32, i32) {
    %c0_i32 = arith.constant 0 : i32
    %c0_i32_0 = arith.constant 0 : i32
    %c0_i32_1 = arith.constant 0 : i32
    return %c0_i32, %c0_i32_0 : i32, i32
  }
  func.func @transform_4(%arg0: i32) -> (i32, i32) {
    %c0_i32 = arith.constant 0 : i32
    %c0_i32_0 = arith.constant 0 : i32
    %c0_i32_1 = arith.constant 0 : i32
    return %c0_i32, %c0_i32_0 : i32, i32
  }
  func.func @transform_5(%arg0: i32) -> (i32, i32) {
    %c0_i32 = arith.constant 0 : i32
    %c0_i32_0 = arith.constant 0 : i32
    %c0_i32_1 = arith.constant 0 : i32
    return %c0_i32, %c0_i32_0 : i32, i32
  }
  func.func @transform_6(%arg0: i32) -> (i32, i32) {
    %c0_i32 = arith.constant 0 : i32
    %c0_i32_0 = arith.constant 0 : i32
    %c0_i32_1 = arith.constant 0 : i32
    return %c0_i32, %c0_i32_0 : i32, i32
  }
  func.func @transform_7(%arg0: i32) -> (i32, i32) {
    %c0_i32 = arith.constant 0 : i32
    %c0_i32_0 = arith.constant 0 : i32
    return %arg0, %c0_i32 : i32, i32
  }
}

</mosaic_0001>

<llo_original>
// kernel: _lambda_.1
$region0: #{_lambda_.1}
  #allocation0 [shape = 'u32[]', space=smem, size = 0x4, offset = 0x4, fixed_abs, tag = 'smem constant byte address 0x4 - core index']
  #allocation1 [shape = 'u32[72,128]{1,0:T(1,128)}', space=vmem, size = 0x9000, scoped, tag = 'internal scratch']
  %s0 = inlined_call_operand.hbm [shape: f32[8,32], index: 0, kind: input, shape index: {}]
  %s1 = inlined_call_operand.hbm [shape: f32[32,128], index: 1, kind: input, shape index: {}]
  %s2 = inlined_call_operand.hbm [shape: f32[1,128], index: 2, kind: input, shape index: {}]
  %s3 = inlined_call_operand.hbm [shape: f32[128,128], index: 3, kind: input, shape index: {}]
  %s4 = inlined_call_operand.vmem [shape: f32[1,128], index: 4, kind: input, shape index: {}]
  %s5 = inlined_call_operand.hbm [shape: f32[128,128], index: 5, kind: input, shape index: {}]
  %s6 = inlined_call_operand.vmem [shape: f32[1,128], index: 6, kind: input, shape index: {}]
  %s7 = inlined_call_operand.hbm [shape: f32[8,128], index: 7, kind: output, shape index: {}]
  %s8 = sld [smem:[#allocation0]]
  $region58: #{_lambda_.1} parent=0
    _
  %s10 = ssub.s32 1, %s8
  %s11 = scalar_select 0, %s10, %s8
  $region1: #{_lambda_.1} parent=0
    #allocation2 [shape = 'u8[4096]{0}', space=vmem, size = 0x1000, scoped, tag = 'input window, operand 0, single buffered']
    #allocation3 [shape = 's32[1]{0}', space=sflag, size = 0x4, scoped, tag = 'scoped memory for _lambda_.1']
    #allocation4 [shape = 's32[1]{0}', space=sflag, size = 0x4, scoped, tag = 'scoped memory for _lambda_.1']
    #allocation5 [shape = 'u8[16384]{0}', space=vmem, size = 0x4000, scoped, tag = 'input window, operand 1, single buffered']
    #allocation6 [shape = 's32[1]{0}', space=sflag, size = 0x4, scoped, tag = 'scoped memory for _lambda_.1']
    #allocation7 [shape = 'u8[512]{0}', space=vmem, size = 0x400, scoped, tag = 'input window, operand 2, single buffered']
    #allocation8 [shape = 'u8[65536]{0}', space=vmem, size = 0x10000, scoped, tag = 'input window, operand 3, single buffered']
    #allocation9 [shape = 's32[1]{0}', space=sflag, size = 0x4, scoped, tag = 'scoped memory for _lambda_.1']
    #allocation10 [shape = 'u8[65536]{0}', space=vmem, size = 0x10000, scoped, tag = 'input window, operand 5, single buffered']
    #allocation11 [shape = 'u8[4096]{0}', space=vmem, size = 0x1000, scoped, tag = 'output window, operand 0, single buffered']
    %12 = vsyncpa [#allocation3], 0
    %13 = vsyncpa [#allocation6], 0
    %14 = vsyncpa [#allocation9], 0
    %15 = vsyncpa [#allocation4], 0
    // Predicated region
    $region2: #{_lambda_.1} parent=1 // pred_check
      _
    $region3: #{_lambda_.1} parent=1 // pred_check_branch
      %17 = sbr.rel (0) target = $region5
    $region4: #{_lambda_.1} parent=1 // pred_region
      %19 = vsyncadd [#allocation3], 0
      %s21 = sshll.u32 %s0, 4
      %s22 = int_to_ptr.hbm [resolvable:$true] %s21
      %s23 = sshll.u32 [#allocation2], 4
      %s24 = int_to_ptr.vmem [resolvable:$true] %s23
      %26 = dma.hbm_to_vmem [thread:$0]  %s22, 128, %s24, [#allocation3]
    $region5: #{_lambda_.1} parent=1 // pred_fallthru
      _
    // Predicated region
    $region6: #{_lambda_.1} parent=1 // pred_check
      _
    $region7: #{_lambda_.1} parent=1 // pred_check_branch
      %28 = sbr.rel (0) target = $region9
    $region8: #{_lambda_.1} parent=1 // pred_region
      %30 = vsyncadd [#allocation6], 0
      %s31 = sshll.u32 %s1, 4
      %s32 = int_to_ptr.hbm [resolvable:$true] %s31
      %s33 = sshll.u32 [#allocation5], 4
      %s34 = int_to_ptr.vmem [resolvable:$true] %s33
      %39 = dma.hbm_to_vmem [thread:$0]  %s32, 512, %s34, [#allocation6], 128, 128, 8
    $region9: #{_lambda_.1} parent=1 // pred_fallthru
      _
    // Predicated region
    $region10: #{_lambda_.1} parent=1 // pred_check
      _
    $region11: #{_lambda_.1} parent=1 // pred_check_branch
      %41 = sbr.rel (0) target = $region13
    $region12: #{_lambda_.1} parent=1 // pred_region
      %43 = vsyncadd [#allocation6], 0
      %s45 = sshll.u32 %s2, 4
      %s46 = int_to_ptr.hbm [resolvable:$true] %s45
      %s47 = sshll.u32 [#allocation7], 4
      %s48 = int_to_ptr.vmem [resolvable:$true] %s47
      %50 = dma.hbm_to_vmem [thread:$0]  %s46, 16, %s48, [#allocation6]
    $region13: #{_lambda_.1} parent=1 // pred_fallthru
      _
    // Predicated region
    $region14: #{_lambda_.1} parent=1 // pred_check
      _
    $region15: #{_lambda_.1} parent=1 // pred_check_branch
      %52 = sbr.rel (0) target = $region17
    $region16: #{_lambda_.1} parent=1 // pred_region
      %54 = vsyncadd [#allocation9], 0
      %s55 = sshll.u32 %s3, 4
      %s56 = int_to_ptr.hbm [resolvable:$true] %s55
      %s57 = sshll.u32 [#allocation8], 4
      %s58 = int_to_ptr.vmem [resolvable:$true] %s57
      %63 = dma.hbm_to_vmem [thread:$0]  %s56, 2048, %s58, [#allocation9], 128, 128, 8
    $region17: #{_lambda_.1} parent=1 // pred_fallthru
      _
    // Predicated region
    $region18: #{_lambda_.1} parent=1 // pred_check
      _
    $region19: #{_lambda_.1} parent=1 // pred_check_branch
      %65 = sbr.rel (0) target = $region21
    $region20: #{_lambda_.1} parent=1 // pred_region
      _
    $region21: #{_lambda_.1} parent=1 // pred_fallthru
      _
    // Predicated region
    $region22: #{_lambda_.1} parent=1 // pred_check
      _
    $region23: #{_lambda_.1} parent=1 // pred_check_branch
      %67 = sbr.rel (0) target = $region25
    $region24: #{_lambda_.1} parent=1 // pred_region
      %69 = vsyncadd [#allocation9], 0
      %s70 = sshll.u32 %s5, 4
      %s71 = int_to_ptr.hbm [resolvable:$true] %s70
      %s72 = sshll.u32 [#allocation10], 4
      %s73 = int_to_ptr.vmem [resolvable:$true] %s72
      %78 = dma.hbm_to_vmem [thread:$0]  %s71, 2048, %s73, [#allocation9], 128, 128, 8
    $region25: #{_lambda_.1} parent=1 // pred_fallthru
      _
    // Predicated region
    $region26: #{_lambda_.1} parent=1 // pred_check
      _
    $region27: #{_lambda_.1} parent=1 // pred_check_branch
      %80 = sbr.rel (0) target = $region29
    $region28: #{_lambda_.1} parent=1 // pred_region
      _
    $region29: #{_lambda_.1} parent=1 // pred_fallthru
      _
    // Predicated region
    $region30: #{_lambda_.1} parent=1 // pred_check
      _
    $region31: #{_lambda_.1} parent=1 // pred_check_branch
      %82 = sbr.rel (0) target = $region33
    $region32: #{_lambda_.1} parent=1 // pred_region
      %84 = dma.done [#allocation3], 128
    $region33: #{_lambda_.1} parent=1 // pred_fallthru
      _
    // Predicated region
    $region34: #{_lambda_.1} parent=1 // pred_check
      _
    $region35: #{_lambda_.1} parent=1 // pred_check_branch
      %86 = sbr.rel (0) target = $region37
    $region36: #{_lambda_.1} parent=1 // pred_region
      %88 = dma.done [#allocation6], 512
    $region37: #{_lambda_.1} parent=1 // pred_fallthru
      _
    // Predicated region
    $region38: #{_lambda_.1} parent=1 // pred_check
      _
    $region39: #{_lambda_.1} parent=1 // pred_check_branch
      %90 = sbr.rel (0) target = $region41
    $region40: #{_lambda_.1} parent=1 // pred_region
      %92 = dma.done [#allocation6], 16
    $region41: #{_lambda_.1} parent=1 // pred_fallthru
      _
    // Predicated region
    $region42: #{_lambda_.1} parent=1 // pred_check
      _
    $region43: #{_lambda_.1} parent=1 // pred_check_branch
      %94 = sbr.rel (0) target = $region45
    $region44: #{_lambda_.1} parent=1 // pred_region
      %96 = dma.done [#allocation9], 2048
    $region45: #{_lambda_.1} parent=1 // pred_fallthru
      _
    // Predicated region
    $region46: #{_lambda_.1} parent=1 // pred_check
      _
    $region47: #{_lambda_.1} parent=1 // pred_check_branch
      %98 = sbr.rel (0) target = $region49
    $region48: #{_lambda_.1} parent=1 // pred_region
      %100 = dma.done [#allocation9], 2048
    $region49: #{_lambda_.1} parent=1 // pred_fallthru
      _
    %v101 = vld [vmem:[#allocation2] sm:$0xff]
    %v102 = vld [vmem:[#allocation5] sm:$0xff]
    %v103 = vld [vmem:[#allocation5 + $0x8] sm:$0xff]
    %v104 = vld [vmem:[#allocation5 + $0x10] sm:$0xff]
    %v105 = vld [vmem:[#allocation5 + $0x18] sm:$0xff]
    %v106 = vld [vmem:[#allocation7] sm:$0x1]
    %v108 = vperm.slane %v106, 0
    %vm110 = vcmask 261120
    %v112 = vsel %vm110, %v101, 0
    %114 = vmatpush.msra.mxu0 0.0
    %115 = vmatpush.msra.mxu0 0.0
    %116 = vmatpush.msra.mxu0 0.0
    %117 = vmatpush.msra.mxu0 0.0
    %118 = vmatpush.msra.mxu0 0.0
    %119 = vmatpush.msra.mxu0 0.0
    %120 = vmatpush.msra.mxu0 0.0
    %121 = vmatpush.msra.mxu0 0.0
    %122 = vmatpush.msra.mxu0 0.0
    %123 = vmatpush.msra.mxu0 0.0
    %124 = vmatpush.msra.mxu0 0.0
    %125 = vmatpush.msra.mxu0 0.0
    %126 = vmatpush.msra.mxu0 %v105
    %127 = vmatpush.msra.mxu0 %v104
    %128 = vmatpush.msra.mxu0 %v103
    %129 = vmatpush.msra.mxu0 %v102
    %130 = vmatmul.f32.gmra.mxu0 %v112
    %v131 = vpop.f32.mrf.mxu0
    %v132 = vadd.f32 %v108, %v131
    %133 = vdwg.mxu0
    %v134 = vtanh.pop %v132
    %v135 = vld [vmem:[#allocation8] sm:$0xff]
    %v136 = vld [vmem:[#allocation8 + $0x8] sm:$0xff]
    %v137 = vld [vmem:[#allocation8 + $0x10] sm:$0xff]
    %v138 = vld [vmem:[#allocation8 + $0x18] sm:$0xff]
    %v139 = vld [vmem:[#allocation8 + $0x20] sm:$0xff]
    %v140 = vld [vmem:[#allocation8 + $0x28] sm:$0xff]
    %v141 = vld [vmem:[#allocation8 + $0x30] sm:$0xff]
    %v142 = vld [vmem:[#allocation8 + $0x38] sm:$0xff]
    %v143 = vld [vmem:[#allocation8 + $0x40] sm:$0xff]
    %v144 = vld [vmem:[#allocation8 + $0x48] sm:$0xff]
    %v145 = vld [vmem:[#allocation8 + $0x50] sm:$0xff]
    %v146 = vld [vmem:[#allocation8 + $0x58] sm:$0xff]
    %v147 = vld [vmem:[#allocation8 + $0x60] sm:$0xff]
    %v148 = vld [vmem:[#allocation8 + $0x68] sm:$0xff]
    %v149 = vld [vmem:[#allocation8 + $0x70] sm:$0xff]
    %v150 = vld [vmem:[#allocation8 + $0x78] sm:$0xff]
    %v151 = vld [vmem:[%s4] sm:$0x1]
    %v153 = vperm.slane %v151, 0
    %155 = vmatpush.msra.mxu0 %v150
    %156 = vmatpush.msra.mxu0 %v149
    %157 = vmatpush.msra.mxu0 %v148
    %158 = vmatpush.msra.mxu0 %v147
    %159 = vmatpush.msra.mxu0 %v146
    %160 = vmatpush.msra.mxu0 %v145
    %161 = vmatpush.msra.mxu0 %v144
    %162 = vmatpush.msra.mxu0 %v143
    %163 = vmatpush.msra.mxu0 %v142
    %164 = vmatpush.msra.mxu0 %v141
    %165 = vmatpush.msra.mxu0 %v140
    %166 = vmatpush.msra.mxu0 %v139
    %167 = vmatpush.msra.mxu0 %v138
    %168 = vmatpush.msra.mxu0 %v137
    %169 = vmatpush.msra.mxu0 %v136
    %170 = vmatpush.msra.mxu0 %v135
    %171 = vmatmul.f32.gmra.mxu0 %v134
    %v172 = vpop.f32.mrf.mxu0
    %v173 = vadd.f32 %v153, %v172
    %174 = vdwg.mxu0
    %v175 = vtanh.pop %v173
    %v176 = vld [vmem:[#allocation10] sm:$0xff]
    %v177 = vld [vmem:[#allocation10 + $0x8] sm:$0xff]
    %v178 = vld [vmem:[#allocation10 + $0x10] sm:$0xff]
    %v179 = vld [vmem:[#allocation10 + $0x18] sm:$0xff]
    %v180 = vld [vmem:[#allocation10 + $0x20] sm:$0xff]
    %v181 = vld [vmem:[#allocation10 + $0x28] sm:$0xff]
    %v182 = vld [vmem:[#allocation10 + $0x30] sm:$0xff]
    %v183 = vld [vmem:[#allocation10 + $0x38] sm:$0xff]
    %v184 = vld [vmem:[#allocation10 + $0x40] sm:$0xff]
    %v185 = vld [vmem:[#allocation10 + $0x48] sm:$0xff]
    %v186 = vld [vmem:[#allocation10 + $0x50] sm:$0xff]
    %v187 = vld [vmem:[#allocation10 + $0x58] sm:$0xff]
    %v188 = vld [vmem:[#allocation10 + $0x60] sm:$0xff]
    %v189 = vld [vmem:[#allocation10 + $0x68] sm:$0xff]
    %v190 = vld [vmem:[#allocation10 + $0x70] sm:$0xff]
    %v191 = vld [vmem:[#allocation10 + $0x78] sm:$0xff]
    %v192 = vld [vmem:[%s6] sm:$0x1]
    %v194 = vperm.slane %v192, 0
    %196 = vmatpush.msra.mxu0 %v191
    %197 = vmatpush.msra.mxu0 %v190
    %198 = vmatpush.msra.mxu0 %v189
    %199 = vmatpush.msra.mxu0 %v188
    %200 = vmatpush.msra.mxu0 %v187
    %201 = vmatpush.msra.mxu0 %v186
    %202 = vmatpush.msra.mxu0 %v185
    %203 = vmatpush.msra.mxu0 %v184
    %204 = vmatpush.msra.mxu0 %v183
    %205 = vmatpush.msra.mxu0 %v182
    %206 = vmatpush.msra.mxu0 %v181
    %207 = vmatpush.msra.mxu0 %v180
    %208 = vmatpush.msra.mxu0 %v179
    %209 = vmatpush.msra.mxu0 %v178
    %210 = vmatpush.msra.mxu0 %v177
    %211 = vmatpush.msra.mxu0 %v176
    %212 = vmatmul.f32.gmra.mxu0 %v175
    %v213 = vpop.f32.mrf.mxu0
    %v214 = vadd.f32 %v194, %v213
    %215 = vdwg.mxu0
    %216 = vst [vmem:[#allocation11] sm:$0xff] %v214
    // Predicated region
    $region50: #{_lambda_.1} parent=1 // pred_check
      _
    $region51: #{_lambda_.1} parent=1 // pred_check_branch
      %218 = sbr.rel (0) target = $region53
    $region52: #{_lambda_.1} parent=1 // pred_region
      %220 = vsyncadd [#allocation4], 0
      %s222 = sshll.u32 [#allocation11], 4
      %s223 = int_to_ptr.vmem [resolvable:$true] %s222
      %s224 = sshll.u32 %s7, 4
      %s225 = int_to_ptr.hbm [resolvable:$true] %s224
      %227 = dma.vmem_to_hbm [thread:$0]  %s223, 128, %s225, [#allocation4]
    $region53: #{_lambda_.1} parent=1 // pred_fallthru
      _
    // Predicated region
    $region54: #{_lambda_.1} parent=1 // pred_check
      _
    $region55: #{_lambda_.1} parent=1 // pred_check_branch
      %229 = sbr.rel (0) target = $region57
    $region56: #{_lambda_.1} parent=1 // pred_region
      %231 = dma.done [#allocation4], 128
    $region57: #{_lambda_.1} parent=1 // pred_fallthru
      _
    %232 = vsyncpa [#allocation3], 1
    %233 = vsyncpa [#allocation6], 1
    %234 = vsyncpa [#allocation9], 1
    %235 = vsyncpa [#allocation4], 1

// kernel: _lambda_.1
$region0: #{_lambda_.1}
  #allocation0 [shape = 'u32[]', space=smem, size = 0x4, offset = 0x4, fixed_abs, tag = 'smem constant byte address 0x4 - core index']
  #allocation1 [shape = 'u32[72,128]{1,0:T(1,128)}', space=vmem, size = 0x9000, scoped, tag = 'internal scratch']
  %s0 = inlined_call_operand.hbm [shape: f32[8,32], index: 0, kind: input, shape index: {}]
  %s1 = inlined_call_operand.hbm [shape: f32[32,128], index: 1, kind: input, shape index: {}]
  %s2 = inlined_call_operand.hbm [shape: f32[1,128], index: 2, kind: input, shape index: {}]
  %s3 = inlined_call_operand.hbm [shape: f32[128,128], index: 3, kind: input, shape index: {}]
  %s4 = inlined_call_operand.vmem [shape: f32[1,128], index: 4, kind: input, shape index: {}]
  %s5 = inlined_call_operand.hbm [shape: f32[128,128], index: 5, kind: input, shape index: {}]
  %s6 = inlined_call_operand.vmem [shape: f32[1,128], index: 6, kind: input, shape index: {}]
  %s7 = inlined_call_operand.hbm [shape: f32[8,128], index: 7, kind: output, shape index: {}]
  %s8 = sld [smem:[#allocation0]]
  $region58: #{_lambda_.1} parent=0
    _
  %s10 = ssub.s32 1, %s8
  %s11 = scalar_select 0, %s10, %s8
  $region1: #{_lambda_.1} parent=0
    #allocation2 [shape = 'u8[4096]{0}', space=vmem, size = 0x1000, scoped, tag = 'input window, operand 0, single buffered']
    #allocation3 [shape = 's32[1]{0}', space=sflag, size = 0x4, scoped, tag = 'scoped memory for _lambda_.1']
    #allocation4 [shape = 's32[1]{0}', space=sflag, size = 0x4, scoped, tag = 'scoped memory for _lambda_.1']
    #allocation5 [shape = 'u8[16384]{0}', space=vmem, size = 0x4000, scoped, tag = 'input window, operand 1, single buffered']
    #allocation6 [shape = 's32[1]{0}', space=sflag, size = 0x4, scoped, tag = 'scoped memory for _lambda_.1']
    #allocation7 [shape = 'u8[512]{0}', space=vmem, size = 0x400, scoped, tag = 'input window, operand 2, single buffered']
    #allocation8 [shape = 'u8[65536]{0}', space=vmem, size = 0x10000, scoped, tag = 'input window, operand 3, single buffered']
    #allocation9 [shape = 's32[1]{0}', space=sflag, size = 0x4, scoped, tag = 'scoped memory for _lambda_.1']
    #allocation10 [shape = 'u8[65536]{0}', space=vmem, size = 0x10000, scoped, tag = 'input window, operand 5, single buffered']
    #allocation11 [shape = 'u8[4096]{0}', space=vmem, size = 0x1000, scoped, tag = 'output window, operand 0, single buffered']
    %12 = vsyncpa [#allocation3], 0
    %13 = vsyncpa [#allocation6], 0
    %14 = vsyncpa [#allocation9], 0
    %15 = vsyncpa [#allocation4], 0
    // Predicated region
    $region2: #{_lambda_.1} parent=1 // pred_check
      _
    $region3: #{_lambda_.1} parent=1 // pred_check_branch
      %17 = sbr.rel (0) target = $region5
    $region4: #{_lambda_.1} parent=1 // pred_region
      %19 = vsyncadd [#allocation3], 0
      %s21 = sshll.u32 %s0, 4
      %s22 = int_to_ptr.hbm [resolvable:$true] %s21
      %s23 = sshll.u32 [#allocation2], 4
      %s24 = int_to_ptr.vmem [resolvable:$true] %s23
      %26 = dma.hbm_to_vmem [thread:$0]  %s22, 128, %s24, [#allocation3]
    $region5: #{_lambda_.1} parent=1 // pred_fallthru
      _
    // Predicated region
    $region6: #{_lambda_.1} parent=1 // pred_check
      _
    $region7: #{_lambda_.1} parent=1 // pred_check_branch
      %28 = sbr.rel (0) target = $region9
    $region8: #{_lambda_.1} parent=1 // pred_region
      %30 = vsyncadd [#allocation6], 0
      %s31 = sshll.u32 %s1, 4
      %s32 = int_to_ptr.hbm [resolvable:$true] %s31
      %s33 = sshll.u32 [#allocation5], 4
      %s34 = int_to_ptr.vmem [resolvable:$true] %s33
      %39 = dma.hbm_to_vmem [thread:$0]  %s32, 512, %s34, [#allocation6], 128, 128, 8
    $region9: #{_lambda_.1} parent=1 // pred_fallthru
      _
    // Predicated region
    $region10: #{_lambda_.1} parent=1 // pred_check
      _
    $region11: #{_lambda_.1} parent=1 // pred_check_branch
      %41 = sbr.rel (0) target = $region13
    $region12: #{_lambda_.1} parent=1 // pred_region
      %43 = vsyncadd [#allocation6], 0
      %s45 = sshll.u32 %s2, 4
      %s46 = int_to_ptr.hbm [resolvable:$true] %s45
      %s47 = sshll.u32 [#allocation7], 4
      %s48 = int_to_ptr.vmem [resolvable:$true] %s47
      %50 = dma.hbm_to_vmem [thread:$0]  %s46, 16, %s48, [#allocation6]
    $region13: #{_lambda_.1} parent=1 // pred_fallthru
      _
    // Predicated region
    $region14: #{_lambda_.1} parent=1 // pred_check
      _
    $region15: #{_lambda_.1} parent=1 // pred_check_branch
      %52 = sbr.rel (0) target = $region17
    $region16: #{_lambda_.1} parent=1 // pred_region
      %54 = vsyncadd [#allocation9], 0
      %s55 = sshll.u32 %s3, 4
      %s56 = int_to_ptr.hbm [resolvable:$true] %s55
      %s57 = sshll.u32 [#allocation8], 4
      %s58 = int_to_ptr.vmem [resolvable:$true] %s57
      %63 = dma.hbm_to_vmem [thread:$0]  %s56, 2048, %s58, [#allocation9], 128, 128, 8
    $region17: #{_lambda_.1} parent=1 // pred_fallthru
      _
    // Predicated region
    $region18: #{_lambda_.1} parent=1 // pred_check
      _
    $region19: #{_lambda_.1} parent=1 // pred_check_branch
      %65 = sbr.rel (0) target = $region21
    $region20: #{_lambda_.1} parent=1 // pred_region
      _
    $region21: #{_lambda_.1} parent=1 // pred_fallthru
      _
    // Predicated region
    $region22: #{_lambda_.1} parent=1 // pred_check
      _
    $region23: #{_lambda_.1} parent=1 // pred_check_branch
      %67 = sbr.rel (0) target = $region25
    $region24: #{_lambda_.1} parent=1 // pred_region
      %69 = vsyncadd [#allocation9], 0
      %s70 = sshll.u32 %s5, 4
      %s71 = int_to_ptr.hbm [resolvable:$true] %s70
      %s72 = sshll.u32 [#allocation10], 4
      %s73 = int_to_ptr.vmem [resolvable:$true] %s72
      %78 = dma.hbm_to_vmem [thread:$0]  %s71, 2048, %s73, [#allocation9], 128, 128, 8
    $region25: #{_lambda_.1} parent=1 // pred_fallthru
      _
    // Predicated region
    $region26: #{_lambda_.1} parent=1 // pred_check
      _
    $region27: #{_lambda_.1} parent=1 // pred_check_branch
      %80 = sbr.rel (0) target = $region29
    $region28: #{_lambda_.1} parent=1 // pred_region
      _
    $region29: #{_lambda_.1} parent=1 // pred_fallthru
      _
    // Predicated region
    $region30: #{_lambda_.1} parent=1 // pred_check
      _
    $region31: #{_lambda_.1} parent=1 // pred_check_branch
      %82 = sbr.rel (0) target = $region33
    $region32: #{_lambda_.1} parent=1 // pred_region
      %84 = dma.done [#allocation3], 128
    $region33: #{_lambda_.1} parent=1 // pred_fallthru
      _
    // Predicated region
    $region34: #{_lambda_.1} parent=1 // pred_check
      _
    $region35: #{_lambda_.1} parent=1 // pred_check_branch
      %86 = sbr.rel (0) target = $region37
    $region36: #{_lambda_.1} parent=1 // pred_region
      %88 = dma.done [#allocation6], 512
    $region37: #{_lambda_.1} parent=1 // pred_fallthru
      _
    // Predicated region
    $region38: #{_lambda_.1} parent=1 // pred_check
      _
    $region39: #{_lambda_.1} parent=1 // pred_check_branch
      %90 = sbr.rel (0) target = $region41
    $region40: #{_lambda_.1} parent=1 // pred_region
      %92 = dma.done [#allocation6], 16
    $region41: #{_lambda_.1} parent=1 // pred_fallthru
      _
    // Predicated region
    $region42: #{_lambda_.1} parent=1 // pred_check
      _
    $region43: #{_lambda_.1} parent=1 // pred_check_branch
      %94 = sbr.rel (0) target = $region45
    $region44: #{_lambda_.1} parent=1 // pred_region
      %96 = dma.done [#allocation9], 2048
    $region45: #{_lambda_.1} parent=1 // pred_fallthru
      _
    // Predicated region
    $region46: #{_lambda_.1} parent=1 // pred_check
      _
    $region47: #{_lambda_.1} parent=1 // pred_check_branch
      %98 = sbr.rel (0) target = $region49
    $region48: #{_lambda_.1} parent=1 // pred_region
      %100 = dma.done [#allocation9], 2048
    $region49: #{_lambda_.1} parent=1 // pred_fallthru
      _
    %v101 = vld [vmem:[#allocation2] sm:$0xff]
    %v102 = vld [vmem:[#allocation5] sm:$0xff]
    %v103 = vld [vmem:[#allocation5 + $0x8] sm:$0xff]
    %v104 = vld [vmem:[#allocation5 + $0x10] sm:$0xff]
    %v105 = vld [vmem:[#allocation5 + $0x18] sm:$0xff]
    %v106 = vld [vmem:[#allocation7] sm:$0x1]
    %v108 = vperm.slane %v106, 0
    %vm110 = vcmask 261120
    %v112 = vsel %vm110, %v101, 0
    %114 = vmatpush.msra.mxu0 0.0
    %115 = vmatpush.msra.mxu0 0.0
    %116 = vmatpush.msra.mxu0 0.0
    %117 = vmatpush.msra.mxu0 0.0
    %118 = vmatpush.msra.mxu0 0.0
    %119 = vmatpush.msra.mxu0 0.0
    %120 = vmatpush.msra.mxu0 0.0
    %121 = vmatpush.msra.mxu0 0.0
    %122 = vmatpush.msra.mxu0 0.0
    %123 = vmatpush.msra.mxu0 0.0
    %124 = vmatpush.msra.mxu0 0.0
    %125 = vmatpush.msra.mxu0 0.0
    %126 = vmatpush.msra.mxu0 %v105
    %127 = vmatpush.msra.mxu0 %v104
    %128 = vmatpush.msra.mxu0 %v103
    %129 = vmatpush.msra.mxu0 %v102
    %130 = vmatmul.f32.gmra.mxu0 %v112
    %v131 = vpop.f32.mrf.mxu0
    %v132 = vadd.f32 %v108, %v131
    %133 = vdwg.mxu0
    %v134 = vtanh.pop %v132
    %v135 = vld [vmem:[#allocation8] sm:$0xff]
    %v136 = vld [vmem:[#allocation8 + $0x8] sm:$0xff]
    %v137 = vld [vmem:[#allocation8 + $0x10] sm:$0xff]
    %v138 = vld [vmem:[#allocation8 + $0x18] sm:$0xff]
    %v139 = vld [vmem:[#allocation8 + $0x20] sm:$0xff]
    %v140 = vld [vmem:[#allocation8 + $0x28] sm:$0xff]
    %v141 = vld [vmem:[#allocation8 + $0x30] sm:$0xff]
    %v142 = vld [vmem:[#allocation8 + $0x38] sm:$0xff]
    %v143 = vld [vmem:[#allocation8 + $0x40] sm:$0xff]
    %v144 = vld [vmem:[#allocation8 + $0x48] sm:$0xff]
    %v145 = vld [vmem:[#allocation8 + $0x50] sm:$0xff]
    %v146 = vld [vmem:[#allocation8 + $0x58] sm:$0xff]
    %v147 = vld [vmem:[#allocation8 + $0x60] sm:$0xff]
    %v148 = vld [vmem:[#allocation8 + $0x68] sm:$0xff]
    %v149 = vld [vmem:[#allocation8 + $0x70] sm:$0xff]
    %v150 = vld [vmem:[#allocation8 + $0x78] sm:$0xff]
    %v151 = vld [vmem:[%s4] sm:$0x1]
    %v153 = vperm.slane %v151, 0
    %155 = vmatpush.msra.mxu0 %v150
    %156 = vmatpush.msra.mxu0 %v149
    %157 = vmatpush.msra.mxu0 %v148
    %158 = vmatpush.msra.mxu0 %v147
    %159 = vmatpush.msra.mxu0 %v146
    %160 = vmatpush.msra.mxu0 %v145
    %161 = vmatpush.msra.mxu0 %v144
    %162 = vmatpush.msra.mxu0 %v143
    %163 = vmatpush.msra.mxu0 %v142
    %164 = vmatpush.msra.mxu0 %v141
    %165 = vmatpush.msra.mxu0 %v140
    %166 = vmatpush.msra.mxu0 %v139
    %167 = vmatpush.msra.mxu0 %v138
    %168 = vmatpush.msra.mxu0 %v137
    %169 = vmatpush.msra.mxu0 %v136
    %170 = vmatpush.msra.mxu0 %v135
    %171 = vmatmul.f32.gmra.mxu0 %v134
    %v172 = vpop.f32.mrf.mxu0
    %v173 = vadd.f32 %v153, %v172
    %174 = vdwg.mxu0
    %v175 = vtanh.pop %v173
    %v176 = vld [vmem:[#allocation10] sm:$0xff]
    %v177 = vld [vmem:[#allocation10 + $0x8] sm:$0xff]
    %v178 = vld [vmem:[#allocation10 + $0x10] sm:$0xff]
    %v179 = vld [vmem:[#allocation10 + $0x18] sm:$0xff]
    %v180 = vld [vmem:[#allocation10 + $0x20] sm:$0xff]
    %v181 = vld [vmem:[#allocation10 + $0x28] sm:$0xff]
    %v182 = vld [vmem:[#allocation10 + $0x30] sm:$0xff]
    %v183 = vld [vmem:[#allocation10 + $0x38] sm:$0xff]
    %v184 = vld [vmem:[#allocation10 + $0x40] sm:$0xff]
    %v185 = vld [vmem:[#allocation10 + $0x48] sm:$0xff]
    %v186 = vld [vmem:[#allocation10 + $0x50] sm:$0xff]
    %v187 = vld [vmem:[#allocation10 + $0x58] sm:$0xff]
    %v188 = vld [vmem:[#allocation10 + $0x60] sm:$0xff]
    %v189 = vld [vmem:[#allocation10 + $0x68] sm:$0xff]
    %v190 = vld [vmem:[#allocation10 + $0x70] sm:$0xff]
    %v191 = vld [vmem:[#allocation10 + $0x78] sm:$0xff]
    %v192 = vld [vmem:[%s6] sm:$0x1]
    %v194 = vperm.slane %v192, 0
    %196 = vmatpush.msra.mxu0 %v191
    %197 = vmatpush.msra.mxu0 %v190
    %198 = vmatpush.msra.mxu0 %v189
    %199 = vmatpush.msra.mxu0 %v188
    %200 = vmatpush.msra.mxu0 %v187
    %201 = vmatpush.msra.mxu0 %v186
    %202 = vmatpush.msra.mxu0 %v185
    %203 = vmatpush.msra.mxu0 %v184
    %204 = vmatpush.msra.mxu0 %v183
    %205 = vmatpush.msra.mxu0 %v182
    %206 = vmatpush.msra.mxu0 %v181
    %207 = vmatpush.msra.mxu0 %v180
    %208 = vmatpush.msra.mxu0 %v179
    %209 = vmatpush.msra.mxu0 %v178
    %210 = vmatpush.msra.mxu0 %v177
    %211 = vmatpush.msra.mxu0 %v176
    %212 = vmatmul.f32.gmra.mxu0 %v175
    %v213 = vpop.f32.mrf.mxu0
    %v214 = vadd.f32 %v194, %v213
    %215 = vdwg.mxu0
    %216 = vst [vmem:[#allocation11] sm:$0xff] %v214
    // Predicated region
    $region50: #{_lambda_.1} parent=1 // pred_check
      _
    $region51: #{_lambda_.1} parent=1 // pred_check_branch
      %218 = sbr.rel (0) target = $region53
    $region52: #{_lambda_.1} parent=1 // pred_region
      %220 = vsyncadd [#allocation4], 0
      %s222 = sshll.u32 [#allocation11], 4
      %s223 = int_to_ptr.vmem [resolvable:$true] %s222
      %s224 = sshll.u32 %s7, 4
      %s225 = int_to_ptr.hbm [resolvable:$true] %s224
      %227 = dma.vmem_to_hbm [thread:$0]  %s223, 128, %s225, [#allocation4]
    $region53: #{_lambda_.1} parent=1 // pred_fallthru
      _
    // Predicated region
    $region54: #{_lambda_.1} parent=1 // pred_check
      _
    $region55: #{_lambda_.1} parent=1 // pred_check_branch
      %229 = sbr.rel (0) target = $region57
    $region56: #{_lambda_.1} parent=1 // pred_region
      %231 = dma.done [#allocation4], 128
    $region57: #{_lambda_.1} parent=1 // pred_fallthru
      _
    %232 = vsyncpa [#allocation3], 1
    %233 = vsyncpa [#allocation6], 1
    %234 = vsyncpa [#allocation9], 1
    %235 = vsyncpa [#allocation4], 1

</llo_original>
